<compile_context>
chip_gen: v7x
topology: tpu7x:2x2x1
jax: 0.10.0
libtpu: 0.0.40
codegen_flags: <defaults>
</compile_context>

<pallas_src>
import jax
import jax.numpy as jnp
from jax.experimental import pallas as pl
from jax.experimental.pallas import tpu as pltpu

_LANE = 128
_SMALL_BYTES = 1 << 20        # below this: one full-extent block is cheapest
_VMEM_LIMIT = 32 << 20        # safe on v5e/v6e (128 MiB) and v7x (64 MiB)


def _scale_kernel(scale_ref, x_ref, o_ref):
    # Hoist + cast the scalar once; multiply in the input dtype (no per-vreg
    # f32 promotion for bf16/fp8 inputs). Final cast is a no-op for matching
    # dtypes but keeps the kernel generic.
    s = scale_ref[0, 0].astype(x_ref.dtype)
    o_ref[...] = (x_ref[...] * s).astype(o_ref.dtype)


def _compiler_params():
    return pltpu.CompilerParams(
        dimension_semantics=("parallel",),   # lets v7x shard steps across 2 TCs
        vmem_limit_bytes=_VMEM_LIMIT,
    )


def _cost(n_elems, itemsize):
    # Pure streaming: 1 mul/elem, read + write of the whole tensor.
    return pl.CostEstimate(
        flops=n_elems, transcendentals=0, bytes_accessed=2 * n_elems * itemsize
    )


def _forward_aligned(x2d, scale_arr, *, block_bytes, donate):
    """Hot path: x.size % 128 == 0, x viewed as a lane-dense (rows, 128) slab."""
    rows, lane = x2d.shape
    itemsize = x2d.dtype.itemsize
    total_bytes = rows * lane * itemsize

    # Dtype-aware block: ~block_bytes of input per grid step, rows a multiple
    # of 8 (sublane) -- 8192 rows for f32, 16384 for bf16 at the 4 MiB default.
    target_rows = max(8, (block_bytes // (lane * itemsize)) // 8 * 8)

    if total_bytes > _SMALL_BYTES:
        # Force at least two (balanced) grid steps so both v7x TensorCores get
        # work, then cap at the target block size.
        half_rows = (((rows + 1) // 2) + 7) // 8 * 8
        block_rows = min(target_rows, half_rows)
    else:
        block_rows = min(target_rows, rows)
    block_rows = min(block_rows, rows)     # full-extent block when tiny
    grid = (pl.cdiv(rows, block_rows),)    # ragged last block masked by Pallas

    kwargs = {}
    if donate:
        # Caller promises x is donated: reuse its HBM buffer for the output.
        kwargs["input_output_aliases"] = {1: 0}

    return pl.pallas_call(
        _scale_kernel,
        out_shape=jax.ShapeDtypeStruct((rows, lane), x2d.dtype),
        grid_spec=pltpu.PrefetchScalarGridSpec(
            num_scalar_prefetch=0,
            grid=grid,
            in_specs=[
                pl.BlockSpec(memory_space=pltpu.SMEM),               # scale (1,1)
                pl.BlockSpec((block_rows, lane), lambda i: (i, 0)),  # x tile
            ],
            out_specs=pl.BlockSpec((block_rows, lane), lambda i: (i, 0)),
        ),
        compiler_params=_compiler_params(),
        cost_estimate=_cost(rows * lane, itemsize),
        **kwargs,
    )(scale_arr, x2d)


def _forward_ragged(x, scale_arr, *, block_bytes):
    """x.size % 128 != 0: no pad, no slice. Run on the original (rank>=2) shape,
    trailing two dims kept whole, collapsed leading dim tiled."""
    orig_shape = x.shape
    dtype = x.dtype
    itemsize = dtype.itemsize

    if x.ndim < 2:
        x3 = x.reshape(1, 1, x.size)
    elif x.ndim == 2:
        x3 = x.reshape(1, *x.shape)
    else:
        lead = 1
        for d in x.shape[:-2]:
            lead *= d
        x3 = x.reshape(lead, x.shape[-2], x.shape[-1])

    B, H, W = x3.shape
    # Physical footprint of one leading index after (8,128) VMEM tile padding.
    row_bytes = (-(-H // 8) * 8) * (-(-W // _LANE) * _LANE) * itemsize
    block_b = max(1, min(B, block_bytes // max(row_bytes, 1)))
    grid = (pl.cdiv(B, block_b),)          # ragged last leading block masked

    # Give the compiler headroom if a single leading index is already large.
    vmem_limit = max(_VMEM_LIMIT, min(4 * row_bytes * block_b + (2 << 20), 100 << 20))
    # TODO(synk): an enormous non-128-divisible 1-D vector (padded row > ~8 MiB)
    # would need a streamed 1-D layout instead of this whole-trailing-dims path.

    out = pl.pallas_call(
        _scale_kernel,
        out_shape=jax.ShapeDtypeStruct((B, H, W), dtype),
        grid_spec=pltpu.PrefetchScalarGridSpec(
            num_scalar_prefetch=0,
            grid=grid,
            in_specs=[
                pl.BlockSpec(memory_space=pltpu.SMEM),
                pl.BlockSpec((block_b, H, W), lambda i: (i, 0, 0)),
            ],
            out_specs=pl.BlockSpec((block_b, H, W), lambda i: (i, 0, 0)),
        ),
        compiler_params=pltpu.CompilerParams(
            dimension_semantics=("parallel",),
            vmem_limit_bytes=vmem_limit,
        ),
        cost_estimate=_cost(B * H * W, itemsize),
    )(scale_arr, x3)
    return out.reshape(orig_shape)


def scale_forward(x, scale, *, block_bytes=4 << 20, donate_x=False):
    """Compute x * scale with a Pallas TPU kernel.

    x          : arbitrary-shaped float array (e.g. NCHW activation).
    scale      : scalar float32 (the learnable parameter).
    block_bytes: target input bytes per grid step (~4 MiB default).
    donate_x   : alias the output onto x's buffer (only if the caller donates x).
    """
    orig_shape = x.shape
    n = x.size
    if n == 0:
        return x
    scale_arr = jnp.asarray(scale, dtype=jnp.float32).reshape(1, 1)

    if n % _LANE == 0:
        x2d = x.reshape(-1, _LANE)   # metadata-only reshape; no extra HBM pass
        out = _forward_aligned(x2d, scale_arr, block_bytes=block_bytes,
                               donate=donate_x)
        return out.reshape(orig_shape)
    return _forward_ragged(x, scale_arr, block_bytes=block_bytes)


class Scale:
    """JAX/Pallas equivalent of the PyTorch `Scale` module (forward pass)."""

    def __init__(self, init_value=1.0):
        # Matches nn.Parameter(torch.tensor(init_value, dtype=torch.float32)).
        self.scale = jnp.asarray(init_value, dtype=jnp.float32)

    def __call__(self, x):
        return scale_forward(x, self.scale)


if __name__ == "__main__":
    key = jax.random.PRNGKey(0)
    k0, k1, k2, k3 = jax.random.split(key, 4)

    module = Scale(init_value=1.5)

    # 1) Aligned NCHW activation (2*4*16*16 = 2048 elements, % 128 == 0).
    x = jax.random.normal(k0, (2, 4, 16, 16), dtype=jnp.float32)
    y = module(x)
    jax.block_until_ready(y)
    assert y.shape == x.shape and y.dtype == x.dtype
    assert jnp.allclose(y, x * jnp.float32(1.5), atol=1e-6), "aligned mismatch"

    # 2) Aligned multi-block with ragged last row-block (rows=13, block rows=8).
    x_mb = jax.random.normal(k1, (13, 128), dtype=jnp.float32)
    y_mb = scale_forward(x_mb, jnp.float32(2.0), block_bytes=8 * 128 * 4)
    jax.block_until_ready(y_mb)
    assert jnp.allclose(y_mb, x_mb * jnp.float32(2.0), atol=1e-6), "multi-block mismatch"

    # 3) bf16 input: scalar cast once inside the kernel, output stays bf16.
    x_bf = jax.random.normal(k2, (2, 4, 16, 16), dtype=jnp.bfloat16)
    y_bf = scale_forward(x_bf, jnp.float32(-0.5))
    jax.block_until_ready(y_bf)
    assert y_bf.dtype == jnp.bfloat16
    assert jnp.allclose(y_bf.astype(jnp.float32),
                        (x_bf * jnp.bfloat16(-0.5)).astype(jnp.float32),
                        atol=1e-2, rtol=1e-2), "bf16 mismatch"

    # 4) Ragged total size (3*5*7*9 = 945, % 128 != 0): no pad/slice path.
    x_odd = jax.random.normal(k3, (3, 5, 7, 9), dtype=jnp.float32)
    y_odd = scale_forward(x_odd, jnp.float32(-0.75))
    jax.block_until_ready(y_odd)
    assert jnp.allclose(y_odd, x_odd * jnp.float32(-0.75), atol=1e-6), "ragged mismatch"

    # 4b) Same ragged input but force a multi-step grid over the leading dim.
    y_odd2 = scale_forward(x_odd, jnp.float32(0.25), block_bytes=2 * 8 * 128 * 4)
    jax.block_until_ready(y_odd2)
    assert jnp.allclose(y_odd2, x_odd * jnp.float32(0.25), atol=1e-6), \
        "ragged multi-block mismatch"

    print("KERNEL_OK")
</pallas_src>

<mosaic_0001>
module attributes {stable_mosaic.version = 11 : i64} {
  func.func @_scale_kernel(%arg0: i32, %arg1: memref<1x1xf32, #tpu.memory_space<smem>>, %arg2: memref<16x128xf32, #tpu.memory_space<vmem>>, %arg3: memref<16x128xf32, #tpu.memory_space<vmem>>) attributes {dimension_semantics = [#tpu.dimension_semantics<parallel>], iteration_bounds = array<i64: 1>, scalar_prefetch = 0 : i64, scratch_operands = 0 : i64, tpu.core_type = #tpu.core_type<tc>, window_params = [{transform_indices = @transform_0, window_bounds = array<i64: 1, 1>}, {transform_indices = @transform_1, window_bounds = array<i64: 16, 128>}, {transform_indices = @transform_2, window_bounds = array<i64: 16, 128>}]} {
    %c0 = arith.constant 0 : index
    %c0_0 = arith.constant 0 : index
    %0 = memref.load %arg1[%c0, %c0_0] : memref<1x1xf32, #tpu.memory_space<smem>>
    %c0_1 = arith.constant 0 : index
    %c0_2 = arith.constant 0 : index
    %1 = vector.load %arg2[%c0_1, %c0_2] : memref<16x128xf32, #tpu.memory_space<vmem>>, vector<16x128xf32>
    %2 = vector.broadcast %0 : f32 to vector<16x128xf32>
    %3 = arith.mulf %1, %2 : vector<16x128xf32>
    %c0_3 = arith.constant 0 : index
    %c0_4 = arith.constant 0 : index
    %4 = vector.load %arg3[%c0_3, %c0_4] : memref<16x128xf32, #tpu.memory_space<vmem>>, vector<16x128xf32>
    tpu.vector_store %arg3[%c0_3, %c0_4], %3 {strides = array<i32>} : memref<16x128xf32, #tpu.memory_space<vmem>>, vector<16x128xf32>,
    return
  }
  func.func @transform_0(%arg0: i32) -> (i32, i32) {
    %c0_i32 = arith.constant 0 : i32
    %c0_i32_0 = arith.constant 0 : i32
    %c0_i32_1 = arith.constant 0 : i32
    return %c0_i32, %c0_i32_0 : i32, i32
  }
  func.func @transform_1(%arg0: i32) -> (i32, i32) {
    %c0_i32 = arith.constant 0 : i32
    %c0_i32_0 = arith.constant 0 : i32
    return %arg0, %c0_i32 : i32, i32
  }
  func.func @transform_2(%arg0: i32) -> (i32, i32) {
    %c0_i32 = arith.constant 0 : i32
    %c0_i32_0 = arith.constant 0 : i32
    return %arg0, %c0_i32 : i32, i32
  }
}

</mosaic_0001>

<llo_original>
// kernel: tpu_custom_call.1
$region0: #{tpu_custom_call.1}
  #allocation0 [shape = 'u32[]', space=smem, size = 0x4, offset = 0x4, fixed_abs, tag = 'smem constant byte address 0x4 - core index']
  #allocation1 [shape = 'u32[144,128]{1,0:T(1,128)}', space=vmem, size = 0x12000, scoped, tag = 'internal scratch']
  #allocation2 [shape = 'f32[1,1]{1,0:T(1,128)S(6)}', space=smem, size = 0x200, scoped, tag = 'scoped memory for tpu_custom_call.1']
  %s0 = inlined_call_operand.<no memory space> [shape: f32[1,1], index: 0, kind: input, shape index: {}]
  %s1 = inlined_call_operand.hbm [shape: f32[16,128], index: 1, kind: input, shape index: {}]
  %s2 = inlined_call_operand.hbm [shape: f32[16,128], index: 2, kind: output, shape index: {}]
  %s3 = sld [smem:[#allocation0]]
  $region22: #{tpu_custom_call.1} parent=0
    _
  %s5 = ssub.s32 1, %s3
  %s6 = scalar_select 0, %s5, %s3
  %7 = sst [smem:[#allocation2]] %s0
  $region1: #{tpu_custom_call.1} parent=0
    #allocation3 [shape = 'u8[8192]{0}', space=vmem, size = 0x2000, scoped, tag = 'input window, operand 1, single buffered']
    #allocation4 [shape = 's32[1]{0}', space=sflag, size = 0x4, scoped, tag = 'scoped memory for tpu_custom_call.1']
    #allocation5 [shape = 's32[1]{0}', space=sflag, size = 0x4, scoped, tag = 'scoped memory for tpu_custom_call.1']
    #allocation6 [shape = 'u8[8192]{0}', space=vmem, size = 0x2000, scoped, tag = 'output window, operand 0, single buffered']
    %8 = vsyncpa [#allocation4], 0
    %9 = vsyncpa [#allocation5], 0
    // Predicated region
    $region2: #{tpu_custom_call.1} parent=1 // pred_check
      _
    $region3: #{tpu_custom_call.1} parent=1 // pred_check_branch
      %11 = sbr.rel (0) target = $region5
    $region4: #{tpu_custom_call.1} parent=1 // pred_region
      _
    $region5: #{tpu_custom_call.1} parent=1 // pred_fallthru
      _
    // Predicated region
    $region6: #{tpu_custom_call.1} parent=1 // pred_check
      _
    $region7: #{tpu_custom_call.1} parent=1 // pred_check_branch
      %13 = sbr.rel (0) target = $region9
    $region8: #{tpu_custom_call.1} parent=1 // pred_region
      %s15 = ssub.s32 256, 256
      %16 = vsyncadd [#allocation4], %s15
      %s17 = sshll.u32 [#allocation3], 4
      %s18 = int_to_ptr.vmem [resolvable:$true] %s17
      %23 = dma.hbm_to_vmem [thread:$0]  %s1, 256, %s18, [#allocation4], 128, 128, 8
    $region9: #{tpu_custom_call.1} parent=1 // pred_fallthru
      _
    // Predicated region
    $region10: #{tpu_custom_call.1} parent=1 // pred_check
      _
    $region11: #{tpu_custom_call.1} parent=1 // pred_check_branch
      %25 = sbr.rel (0) target = $region13
    $region12: #{tpu_custom_call.1} parent=1 // pred_region
      %26 = dma.done [#allocation4], 256
    $region13: #{tpu_custom_call.1} parent=1 // pred_fallthru
      _
    %s27 = sld [smem:[#allocation2]]
    %v28 = vld [vmem:[#allocation3] sm:$0xff]
    %v29 = vld [vmem:[#allocation3 + $0x8] sm:$0xff]
    %v30 = vstv %s27
    %v31 = vmul.f32 %v28, %v30
    %v32 = vmul.f32 %v29, %v30
    %33 = vst [vmem:[#allocation6] sm:$0xff] %v31
    %34 = vst [vmem:[#allocation6 + $0x8] sm:$0xff] %v32
    // Predicated region
    $region14: #{tpu_custom_call.1} parent=1 // pred_check
      _
    $region15: #{tpu_custom_call.1} parent=1 // pred_check_branch
      %36 = sbr.rel (0) target = $region17
    $region16: #{tpu_custom_call.1} parent=1 // pred_region
      %s38 = ssub.s32 256, 256
      %39 = vsyncadd [#allocation5], %s38
      %s40 = sshll.u32 [#allocation6], 4
      %s41 = int_to_ptr.vmem [resolvable:$true] %s40
      %46 = dma.vmem_to_hbm [thread:$0]  %s41, 256, %s2, [#allocation5], 128, 128, 8
    $region17: #{tpu_custom_call.1} parent=1 // pred_fallthru
      _
    // Predicated region
    $region18: #{tpu_custom_call.1} parent=1 // pred_check
      _
    $region19: #{tpu_custom_call.1} parent=1 // pred_check_branch
      %48 = sbr.rel (0) target = $region21
    $region20: #{tpu_custom_call.1} parent=1 // pred_region
      %49 = dma.done [#allocation5], 256
    $region21: #{tpu_custom_call.1} parent=1 // pred_fallthru
      _
    %50 = vsyncpa [#allocation4], 1
    %51 = vsyncpa [#allocation5], 1

</llo_original>
